<compile_context>
chip_gen: v7x
topology: tpu7x:2x2x1
jax: 0.10.0
libtpu: 0.0.40
codegen_flags: <defaults>
</compile_context>

<pallas_src>
import functools

import jax
import jax.numpy as jnp
import numpy as np
from jax import lax
from jax.experimental import pallas as pl
from jax.experimental.pallas import tpu as pltpu

EPS = 1e-5
_INV_SQRT2 = 0.7071067811865476


def _gelu(x):
    # exact (erf) GELU, matching torch.nn.GELU() default (approximate='none')
    return (0.5 * x) * (1.0 + lax.erf(x * _INV_SQRT2))


def _round_up(n, m):
    return ((n + m - 1) // m) * m


def _bn_affine(v_sum, v_sqsum, gamma, beta, inv_n):
    """One-pass BatchNorm stats folded into a per-channel affine (a, c): x*a + c."""
    m = v_sum * inv_n
    var = jnp.maximum(v_sqsum * inv_n - m * m, 0.0)
    a = lax.rsqrt(var + EPS) * gamma
    c = beta - m * a
    return a, c


def convmixer_stack_kernel(x_ref, masks_ref, dw_w_ref, dw_b_ref, g1_ref, b1_ref,
                           pw_w_ref, pw_b_ref, g2_ref, b2_ref, out_ref, *,
                           K, n_valid, lane_padded):
    d = pl.program_id(0)
    pad = (K - 1) // 2
    inv_n = 1.0 / float(n_valid)

    # Layer 0: bring the input into the VMEM-resident activation slab (out_ref).
    @pl.when(d == 0)
    def _():
        out_ref[...] = x_ref[...]

    x = out_ref[...]                       # (C, BLp) carried activation
    BLp = x.shape[1]

    # ---- depthwise Conv1d(dim, dim, K, groups=dim, padding='same') ----
    # sum over taps: lane-rolled x * precomputed tap-validity mask * per-channel w
    dw_w = dw_w_ref[...]                   # (C, K)
    h = None
    for k in range(K):                     # K static & small -> unrolled
        off = k - pad
        src = x if off == 0 else pltpu.roll(x, shift=(-off) % BLp, axis=1)
        tap = src * masks_ref[k:k + 1, :] * dw_w[:, k:k + 1]
        h = tap if h is None else h + tap
    h = h + dw_b_ref[...]                  # (C, 1) bias

    # ---- GELU -> BatchNorm1d (batch stats over B*L, one-pass) ----
    h = _gelu(h)
    hm = h * masks_ref[pad:pad + 1, :] if lane_padded else h
    a1, c1 = _bn_affine(jnp.sum(hm, axis=1, keepdims=True),
                        jnp.sum(hm * hm, axis=1, keepdims=True),
                        g1_ref[...], b1_ref[...], inv_n)

    # ---- BN affine + residual ----
    y = h * a1 + c1 + x

    # ---- pointwise Conv1d(dim, dim, 1) == (C,C) x (C,B*L) matmul on the MXU ----
    z = jnp.dot(pw_w_ref[...], y, preferred_element_type=jnp.float32) + pw_b_ref[...]

    # ---- GELU -> BatchNorm1d ----
    z = _gelu(z)
    zm = z * masks_ref[pad:pad + 1, :] if lane_padded else z
    a2, c2 = _bn_affine(jnp.sum(zm, axis=1, keepdims=True),
                        jnp.sum(zm * zm, axis=1, keepdims=True),
                        g2_ref[...], b2_ref[...], inv_n)
    out = z * a2 + c2
    if lane_padded:
        # keep padded lanes of the carried activation pinned to zero
        out = out * masks_ref[pad:pad + 1, :]
    out_ref[...] = out


def convmixer_forward(x_ncl, layer_params, *, K):
    """x_ncl: (B, C, L) float32, PyTorch NCL Conv1d convention."""
    B, C, L = x_ncl.shape
    depth = len(layer_params)
    pad = (K - 1) // 2

    # Padding: channels to a sublane multiple (128 only for large C — padding a
    # tiny C to 128 just multiplies VALU work without helping the MXU), lanes
    # (B*L) to a multiple of 128 for lane-dense unmasked stores.
    C_pad = _round_up(C, 128) if C >= 96 else _round_up(C, 8)
    BL = B * L
    BL_pad = _round_up(BL, 128)
    lane_padded = BL_pad != BL

    # activation layout: (B, C, L) -> (C_pad, BL_pad)
    x = jnp.transpose(x_ncl, (1, 0, 2)).reshape(C, BL)
    x = jnp.pad(x, ((0, C_pad - C), (0, BL_pad - BL)))

    # Per-tap validity masks (K, BL_pad), shared by every layer and channel:
    # mask[k, g] = 1 iff tap offset (k - pad) stays inside the same sequence.
    # Padded lanes are 0 for every tap, so the center row doubles as the
    # valid-lane mask used for the BatchNorm statistics.
    lpos = np.full((BL_pad,), -(K + 1), dtype=np.int64)
    lpos[:BL] = np.tile(np.arange(L, dtype=np.int64), B)
    offs = (np.arange(K) - pad)[:, None]
    masks = jnp.asarray(((lpos[None, :] + offs >= 0) &
                         (lpos[None, :] + offs < L)).astype(np.float32))

    # Stack per-layer params along a leading depth axis; pad channels with zeros
    # (padded channels stay identically zero through every layer).
    cpad = (0, C_pad - C)

    def stacked(name, last_pad):
        a = jnp.stack([p[name] for p in layer_params], axis=0)
        return jnp.pad(a, ((0, 0), cpad, last_pad))

    dw_w = stacked("dw_w", (0, 0))        # (depth, C_pad, K)
    dw_b = stacked("dw_b", (0, 0))        # (depth, C_pad, 1)
    g1 = stacked("g1", (0, 0))
    b1 = stacked("b1", (0, 0))
    pw_w = stacked("pw_w", cpad)          # (depth, C_pad, C_pad)
    pw_b = stacked("pw_b", (0, 0))
    g2 = stacked("g2", (0, 0))
    b2 = stacked("b2", (0, 0))

    # VMEM budget: resident slab + input slab + ~5 full-size live temporaries
    # + masks + double-buffered per-layer weights.  Sized against v7x (64 MiB).
    slab = 4 * C_pad * BL_pad
    wt = 4 * (C_pad * K + C_pad * C_pad + 6 * C_pad)
    vmem_need = 8 * slab + 2 * 4 * K * BL_pad + 2 * wt
    if vmem_need > 24 * (1 << 20):
        # TODO(synk): add a BL-tiled two-pass (stats pass + apply pass) variant for
        # activations too large to keep resident in VMEM (esp. v7x's 64 MiB).
        raise ValueError("activation slab too large for the resident-VMEM "
                         "ConvMixer kernel; tile the B*L axis instead")
    vmem_limit = int(min(max(2 * vmem_need, 16 << 20), 32 << 20))

    kernel = functools.partial(convmixer_stack_kernel, K=K, n_valid=BL,
                               lane_padded=lane_padded)

    act_spec = pl.BlockSpec((C_pad, BL_pad), lambda d: (0, 0))

    def per_layer(*shape):
        return pl.BlockSpec((None,) + shape, lambda d: (d,) + (0,) * len(shape))

    # TODO(synk): on v7x, shard the B*L lanes across the 2 TensorCores (core_map)
    # and combine the per-channel BN partial sums via VMEM_SHARED + core_barrier.
    out = pl.pallas_call(
        kernel,
        out_shape=jax.ShapeDtypeStruct((C_pad, BL_pad), jnp.float32),
        grid_spec=pltpu.PrefetchScalarGridSpec(
            num_scalar_prefetch=0,
            grid=(depth,),
            in_specs=[
                act_spec,                                      # x (layer-0 init)
                pl.BlockSpec((K, BL_pad), lambda d: (0, 0)),   # tap masks
                per_layer(C_pad, K),                           # dw_w
                per_layer(C_pad, 1),                           # dw_b
                per_layer(C_pad, 1),                           # g1
                per_layer(C_pad, 1),                           # b1
                per_layer(C_pad, C_pad),                       # pw_w
                per_layer(C_pad, 1),                           # pw_b
                per_layer(C_pad, 1),                           # g2
                per_layer(C_pad, 1),                           # b2
            ],
            out_specs=act_spec),
        compiler_params=pltpu.CompilerParams(
            dimension_semantics=("arbitrary",),
            vmem_limit_bytes=vmem_limit),
    )(x, masks, dw_w, dw_b, g1, b1, pw_w, pw_b, g2, b2)

    out = out[:C, :BL]
    return jnp.transpose(out.reshape(C, B, L), (1, 0, 2))


# ---------------- pure-JAX reference (mirrors the torch module) ----------------
def reference_forward(x, layer_params, *, K):
    pad = (K - 1) // 2

    def bn(v, g, b):
        m = jnp.mean(v, axis=(0, 2), keepdims=True)
        va = jnp.mean((v - m) ** 2, axis=(0, 2), keepdims=True)
        return (v - m) * lax.rsqrt(va + EPS) * g.reshape(1, -1, 1) + b.reshape(1, -1, 1)

    for p in layer_params:
        C = x.shape[1]
        w_dw = p["dw_w"].reshape(C, 1, K)
        h = lax.conv_general_dilated(
            x, w_dw, window_strides=(1,), padding=[(pad, pad)],
            dimension_numbers=("NCH", "OIH", "NCH"), feature_group_count=C)
        h = h + p["dw_b"].reshape(1, C, 1)
        h = bn(_gelu(h), p["g1"], p["b1"])
        y = h + x
        z = jnp.einsum("oi,bil->bol", p["pw_w"], y) + p["pw_b"].reshape(1, C, 1)
        x = bn(_gelu(z), p["g2"], p["b2"])
    return x


def init_params(key, C, K, depth):
    layers = []
    for d in range(depth):
        ks = jax.random.split(jax.random.fold_in(key, d), 8)
        layers.append(dict(
            dw_w=jax.random.normal(ks[0], (C, K), jnp.float32) * (1.0 / K),
            dw_b=0.1 * jax.random.normal(ks[1], (C, 1), jnp.float32),
            g1=1.0 + 0.1 * jax.random.normal(ks[2], (C, 1), jnp.float32),
            b1=0.1 * jax.random.normal(ks[3], (C, 1), jnp.float32),
            pw_w=jax.random.normal(ks[4], (C, C), jnp.float32) / np.sqrt(C),
            pw_b=0.1 * jax.random.normal(ks[5], (C, 1), jnp.float32),
            g2=1.0 + 0.1 * jax.random.normal(ks[6], (C, 1), jnp.float32),
            b2=0.1 * jax.random.normal(ks[7], (C, 1), jnp.float32),
        ))
    return layers


if __name__ == "__main__":
    K = 9
    key = jax.random.PRNGKey(0)
    kx, kp = jax.random.split(key)

    # Config 1: aligned shapes (B*L multiple of 128, C multiple of 8).
    B, C, L, depth = 2, 8, 64, 2
    x = jax.random.normal(kx, (B, C, L), jnp.float32)
    params = init_params(kp, C, K, depth)
    out = jax.block_until_ready(convmixer_forward(x, params, K=K))
    assert out.shape == (B, C, L)
    ref = reference_forward(x, params, K=K)
    np.testing.assert_allclose(np.asarray(out), np.asarray(ref), rtol=1e-3, atol=1e-3)

    # Config 2: exercises the channel- and lane-padding paths.
    B2, C2, L2, depth2 = 2, 6, 40, 3
    x2 = jax.random.normal(jax.random.fold_in(kx, 1), (B2, C2, L2), jnp.float32)
    params2 = init_params(jax.random.fold_in(kp, 1), C2, K, depth2)
    out2 = jax.block_until_ready(convmixer_forward(x2, params2, K=K))
    ref2 = reference_forward(x2, params2, K=K)
    np.testing.assert_allclose(np.asarray(out2), np.asarray(ref2), rtol=1e-3, atol=1e-3)

    print("KERNEL_OK")
</pallas_src>

<mosaic_0001>
module attributes {stable_mosaic.version = 11 : i64} {
  func.func @convmixer_stack_kernel(%arg0: i32, %arg1: memref<8x128xf32, #tpu.memory_space<vmem>>, %arg2: memref<9x128xf32, #tpu.memory_space<vmem>>, %arg3: memref<1x8x9xf32, #tpu.memory_space<vmem>>, %arg4: memref<1x8x1xf32, #tpu.memory_space<vmem>>, %arg5: memref<1x8x1xf32, #tpu.memory_space<vmem>>, %arg6: memref<1x8x1xf32, #tpu.memory_space<vmem>>, %arg7: memref<1x8x8xf32, #tpu.memory_space<vmem>>, %arg8: memref<1x8x1xf32, #tpu.memory_space<vmem>>, %arg9: memref<1x8x1xf32, #tpu.memory_space<vmem>>, %arg10: memref<1x8x1xf32, #tpu.memory_space<vmem>>, %arg11: memref<8x128xf32, #tpu.memory_space<vmem>>) attributes {dimension_semantics = [#tpu.dimension_semantics<arbitrary>], iteration_bounds = array<i64: 2>, scalar_prefetch = 0 : i64, scratch_operands = 0 : i64, tpu.core_type = #tpu.core_type<tc>, window_params = [{pipeline_mode = #tpu.pipeline_mode<synchronous>, transform_indices = @transform_0, window_bounds = array<i64: 8, 128>}, {pipeline_mode = #tpu.pipeline_mode<synchronous>, transform_indices = @transform_1, window_bounds = array<i64: 9, 128>}, {transform_indices = @transform_2, window_bounds = array<i64: 1, 8, 9>}, {transform_indices = @transform_3, window_bounds = array<i64: 1, 8, 1>}, {transform_indices = @transform_4, window_bounds = array<i64: 1, 8, 1>}, {transform_indices = @transform_5, window_bounds = array<i64: 1, 8, 1>}, {transform_indices = @transform_6, window_bounds = array<i64: 1, 8, 8>}, {transform_indices = @transform_7, window_bounds = array<i64: 1, 8, 1>}, {transform_indices = @transform_8, window_bounds = array<i64: 1, 8, 1>}, {transform_indices = @transform_9, window_bounds = array<i64: 1, 8, 1>}, {pipeline_mode = #tpu.pipeline_mode<synchronous>, transform_indices = @transform_10, window_bounds = array<i64: 8, 128>}]} {
    %c0_i32 = arith.constant 0 : i32
    %0 = arith.cmpi eq, %arg0, %c0_i32 : i32
    %1 = arith.extui %0 : i1 to i32
    %c0_i32_0 = arith.constant 0 : i32
    %2 = arith.cmpi ne, %1, %c0_i32_0 : i32
    scf.if %2 {
      %c0_56 = arith.constant 0 : index
      %c0_57 = arith.constant 0 : index
      %159 = vector.load %arg1[%c0_56, %c0_57] : memref<8x128xf32, #tpu.memory_space<vmem>>, vector<8x128xf32>
      %c0_58 = arith.constant 0 : index
      %c0_59 = arith.constant 0 : index
      %160 = vector.load %arg11[%c0_58, %c0_59] : memref<8x128xf32, #tpu.memory_space<vmem>>, vector<8x128xf32>
      tpu.vector_store %arg11[%c0_58, %c0_59], %159 {strides = array<i32>} : memref<8x128xf32, #tpu.memory_space<vmem>>, vector<8x128xf32>,
    } else {
    }
    %c0 = arith.constant 0 : index
    %c0_1 = arith.constant 0 : index
    %3 = vector.load %arg11[%c0, %c0_1] : memref<8x128xf32, #tpu.memory_space<vmem>>, vector<8x128xf32>
    %c0_2 = arith.constant 0 : index
    %c0_3 = arith.constant 0 : index
    %c0_4 = arith.constant 0 : index
    %4 = vector.load %arg3[%c0_2, %c0_3, %c0_4] : memref<1x8x9xf32, #tpu.memory_space<vmem>>, vector<1x8x9xf32>
    %5 = vector.shape_cast %4 : vector<1x8x9xf32> to vector<8x9xf32>
    %c4_i32 = arith.constant 4 : i32
    %6 = tpu.dynamic_rotate %3 by %c4_i32 dim 1 : vector<8x128xf32>, i32 -> vector<8x128xf32>
    %c0_5 = arith.constant 0 : index
    %c0_6 = arith.constant 0 : index
    %7 = vector.load %arg2[%c0_5, %c0_6] : memref<9x128xf32, #tpu.memory_space<vmem>>, vector<1x128xf32>
    %8 = vector.broadcast %7 : vector<1x128xf32> to vector<8x128xf32>
    %9 = arith.mulf %6, %8 : vector<8x128xf32>
    %10 = vector.extract_strided_slice %5 {offsets = [0, 0], sizes = [8, 1], strides = [1, 1]} : vector<8x9xf32> to vector<8x1xf32>
    %11 = vector.broadcast %10 : vector<8x1xf32> to vector<8x128xf32>
    %12 = arith.mulf %9, %11 : vector<8x128xf32>
    %c3_i32 = arith.constant 3 : i32
    %13 = tpu.dynamic_rotate %3 by %c3_i32 dim 1 : vector<8x128xf32>, i32 -> vector<8x128xf32>
    %c1 = arith.constant 1 : index
    %c0_7 = arith.constant 0 : index
    %14 = vector.load %arg2[%c1, %c0_7] : memref<9x128xf32, #tpu.memory_space<vmem>>, vector<1x128xf32>
    %15 = vector.broadcast %14 : vector<1x128xf32> to vector<8x128xf32>
    %16 = arith.mulf %13, %15 : vector<8x128xf32>
    %17 = vector.extract_strided_slice %5 {offsets = [0, 1], sizes = [8, 1], strides = [1, 1]} : vector<8x9xf32> to vector<8x1xf32>
    %18 = vector.broadcast %17 : vector<8x1xf32> to vector<8x128xf32>
    %19 = arith.mulf %16, %18 : vector<8x128xf32>
    %20 = arith.addf %12, %19 : vector<8x128xf32>
    %c2_i32 = arith.constant 2 : i32
    %21 = tpu.dynamic_rotate %3 by %c2_i32 dim 1 : vector<8x128xf32>, i32 -> vector<8x128xf32>
    %c2 = arith.constant 2 : index
    %c0_8 = arith.constant 0 : index
    %22 = vector.load %arg2[%c2, %c0_8] : memref<9x128xf32, #tpu.memory_space<vmem>>, vector<1x128xf32>
    %23 = vector.broadcast %22 : vector<1x128xf32> to vector<8x128xf32>
    %24 = arith.mulf %21, %23 : vector<8x128xf32>
    %25 = vector.extract_strided_slice %5 {offsets = [0, 2], sizes = [8, 1], strides = [1, 1]} : vector<8x9xf32> to vector<8x1xf32>
    %26 = vector.broadcast %25 : vector<8x1xf32> to vector<8x128xf32>
    %27 = arith.mulf %24, %26 : vector<8x128xf32>
    %28 = arith.addf %20, %27 : vector<8x128xf32>
    %c1_i32 = arith.constant 1 : i32
    %29 = tpu.dynamic_rotate %3 by %c1_i32 dim 1 : vector<8x128xf32>, i32 -> vector<8x128xf32>
    %c3 = arith.constant 3 : index
    %c0_9 = arith.constant 0 : index
    %30 = vector.load %arg2[%c3, %c0_9] : memref<9x128xf32, #tpu.memory_space<vmem>>, vector<1x128xf32>
    %31 = vector.broadcast %30 : vector<1x128xf32> to vector<8x128xf32>
    %32 = arith.mulf %29, %31 : vector<8x128xf32>
    %33 = vector.extract_strided_slice %5 {offsets = [0, 3], sizes = [8, 1], strides = [1, 1]} : vector<8x9xf32> to vector<8x1xf32>
    %34 = vector.broadcast %33 : vector<8x1xf32> to vector<8x128xf32>
    %35 = arith.mulf %32, %34 : vector<8x128xf32>
    %36 = arith.addf %28, %35 : vector<8x128xf32>
    %c4 = arith.constant 4 : index
    %c0_10 = arith.constant 0 : index
    %37 = vector.load %arg2[%c4, %c0_10] : memref<9x128xf32, #tpu.memory_space<vmem>>, vector<1x128xf32>
    %38 = vector.broadcast %37 : vector<1x128xf32> to vector<8x128xf32>
    %39 = arith.mulf %3, %38 : vector<8x128xf32>
    %40 = vector.extract_strided_slice %5 {offsets = [0, 4], sizes = [8, 1], strides = [1, 1]} : vector<8x9xf32> to vector<8x1xf32>
    %41 = vector.broadcast %40 : vector<8x1xf32> to vector<8x128xf32>
    %42 = arith.mulf %39, %41 : vector<8x128xf32>
    %43 = arith.addf %36, %42 : vector<8x128xf32>
    %c127_i32 = arith.constant 127 : i32
    %44 = tpu.dynamic_rotate %3 by %c127_i32 dim 1 : vector<8x128xf32>, i32 -> vector<8x128xf32>
    %c5 = arith.constant 5 : index
    %c0_11 = arith.constant 0 : index
    %45 = vector.load %arg2[%c5, %c0_11] : memref<9x128xf32, #tpu.memory_space<vmem>>, vector<1x128xf32>
    %46 = vector.broadcast %45 : vector<1x128xf32> to vector<8x128xf32>
    %47 = arith.mulf %44, %46 : vector<8x128xf32>
    %48 = vector.extract_strided_slice %5 {offsets = [0, 5], sizes = [8, 1], strides = [1, 1]} : vector<8x9xf32> to vector<8x1xf32>
    %49 = vector.broadcast %48 : vector<8x1xf32> to vector<8x128xf32>
    %50 = arith.mulf %47, %49 : vector<8x128xf32>
    %51 = arith.addf %43, %50 : vector<8x128xf32>
    %c126_i32 = arith.constant 126 : i32
    %52 = tpu.dynamic_rotate %3 by %c126_i32 dim 1 : vector<8x128xf32>, i32 -> vector<8x128xf32>
    %c6 = arith.constant 6 : index
    %c0_12 = arith.constant 0 : index
    %53 = vector.load %arg2[%c6, %c0_12] : memref<9x128xf32, #tpu.memory_space<vmem>>, vector<1x128xf32>
    %54 = vector.broadcast %53 : vector<1x128xf32> to vector<8x128xf32>
    %55 = arith.mulf %52, %54 : vector<8x128xf32>
    %56 = vector.extract_strided_slice %5 {offsets = [0, 6], sizes = [8, 1], strides = [1, 1]} : vector<8x9xf32> to vector<8x1xf32>
    %57 = vector.broadcast %56 : vector<8x1xf32> to vector<8x128xf32>
    %58 = arith.mulf %55, %57 : vector<8x128xf32>
    %59 = arith.addf %51, %58 : vector<8x128xf32>
    %c125_i32 = arith.constant 125 : i32
    %60 = tpu.dynamic_rotate %3 by %c125_i32 dim 1 : vector<8x128xf32>, i32 -> vector<8x128xf32>
    %c7 = arith.constant 7 : index
    %c0_13 = arith.constant 0 : index
    %61 = vector.load %arg2[%c7, %c0_13] : memref<9x128xf32, #tpu.memory_space<vmem>>, vector<1x128xf32>
    %62 = vector.broadcast %61 : vector<1x128xf32> to vector<8x128xf32>
    %63 = arith.mulf %60, %62 : vector<8x128xf32>
    %64 = vector.extract_strided_slice %5 {offsets = [0, 7], sizes = [8, 1], strides = [1, 1]} : vector<8x9xf32> to vector<8x1xf32>
    %65 = vector.broadcast %64 : vector<8x1xf32> to vector<8x128xf32>
    %66 = arith.mulf %63, %65 : vector<8x128xf32>
    %67 = arith.addf %59, %66 : vector<8x128xf32>
    %c124_i32 = arith.constant 124 : i32
    %68 = tpu.dynamic_rotate %3 by %c124_i32 dim 1 : vector<8x128xf32>, i32 -> vector<8x128xf32>
    %c8 = arith.constant 8 : index
    %c0_14 = arith.constant 0 : index
    %69 = vector.load %arg2[%c8, %c0_14] : memref<9x128xf32, #tpu.memory_space<vmem>>, vector<1x128xf32>
    %70 = vector.broadcast %69 : vector<1x128xf32> to vector<8x128xf32>
    %71 = arith.mulf %68, %70 : vector<8x128xf32>
    %72 = vector.extract_strided_slice %5 {offsets = [0, 8], sizes = [8, 1], strides = [1, 1]} : vector<8x9xf32> to vector<8x1xf32>
    %73 = vector.broadcast %72 : vector<8x1xf32> to vector<8x128xf32>
    %74 = arith.mulf %71, %73 : vector<8x128xf32>
    %75 = arith.addf %67, %74 : vector<8x128xf32>
    %c0_15 = arith.constant 0 : index
    %c0_16 = arith.constant 0 : index
    %c0_17 = arith.constant 0 : index
    %76 = vector.load %arg4[%c0_15, %c0_16, %c0_17] : memref<1x8x1xf32, #tpu.memory_space<vmem>>, vector<1x8x1xf32>
    %77 = vector.shape_cast %76 : vector<1x8x1xf32> to vector<8x1xf32>
    %78 = vector.broadcast %77 : vector<8x1xf32> to vector<8x128xf32>
    %79 = arith.addf %75, %78 : vector<8x128xf32>
    %cst = arith.constant 5.000000e-01 : f32
    %80 = vector.broadcast %cst : f32 to vector<8x128xf32>
    %81 = arith.mulf %80, %79 : vector<8x128xf32>
    %cst_18 = arith.constant 0.707106769 : f32
    %82 = vector.broadcast %cst_18 : f32 to vector<8x128xf32>
    %83 = arith.mulf %79, %82 : vector<8x128xf32>
    %84 = math.erf %83 : vector<8x128xf32>
    %cst_19 = arith.constant 1.000000e+00 : f32
    %85 = vector.broadcast %cst_19 : f32 to vector<8x128xf32>
    %86 = arith.addf %85, %84 : vector<8x128xf32>
    %87 = arith.mulf %81, %86 : vector<8x128xf32>
    %cst_20 = arith.constant dense<0.000000e+00> : vector<8xf32>
    %88 = vector.multi_reduction <add>, %87, %cst_20 [1] : vector<8x128xf32> to vector<8xf32>
    %89 = vector.shape_cast %88 : vector<8xf32> to vector<8x1xf32>
    %90 = arith.mulf %87, %87 : vector<8x128xf32>
    %cst_21 = arith.constant dense<0.000000e+00> : vector<8xf32>
    %91 = vector.multi_reduction <add>, %90, %cst_21 [1] : vector<8x128xf32> to vector<8xf32>
    %92 = vector.shape_cast %91 : vector<8xf32> to vector<8x1xf32>
    %c0_22 = arith.constant 0 : index
    %c0_23 = arith.constant 0 : index
    %c0_24 = arith.constant 0 : index
    %93 = vector.load %arg5[%c0_22, %c0_23, %c0_24] : memref<1x8x1xf32, #tpu.memory_space<vmem>>, vector<1x8x1xf32>
    %94 = vector.shape_cast %93 : vector<1x8x1xf32> to vector<8x1xf32>
    %c0_25 = arith.constant 0 : index
    %c0_26 = arith.constant 0 : index
    %c0_27 = arith.constant 0 : index
    %95 = vector.load %arg6[%c0_25, %c0_26, %c0_27] : memref<1x8x1xf32, #tpu.memory_space<vmem>>, vector<1x8x1xf32>
    %96 = vector.shape_cast %95 : vector<1x8x1xf32> to vector<8x1xf32>
    %cst_28 = arith.constant 7.812500e-03 : f32
    %97 = vector.broadcast %cst_28 : f32 to vector<8x1xf32>
    %98 = arith.mulf %89, %97 : vector<8x1xf32>
    %cst_29 = arith.constant 7.812500e-03 : f32
    %99 = vector.broadcast %cst_29 : f32 to vector<8x1xf32>
    %100 = arith.mulf %92, %99 : vector<8x1xf32>
    %101 = arith.mulf %98, %98 : vector<8x1xf32>
    %102 = arith.subf %100, %101 : vector<8x1xf32>
    %cst_30 = arith.constant 0.000000e+00 : f32
    %103 = vector.broadcast %cst_30 : f32 to vector<8x1xf32>
    %104 = arith.maximumf %102, %103 : vector<8x1xf32>
    %cst_31 = arith.constant 9.99999974E-6 : f32
    %105 = vector.broadcast %cst_31 : f32 to vector<8x1xf32>
    %106 = arith.addf %104, %105 : vector<8x1xf32>
    %107 = math.rsqrt %106 : vector<8x1xf32>
    %108 = arith.mulf %107, %94 : vector<8x1xf32>
    %109 = arith.mulf %98, %108 : vector<8x1xf32>
    %110 = arith.subf %96, %109 : vector<8x1xf32>
    %111 = vector.broadcast %108 : vector<8x1xf32> to vector<8x128xf32>
    %112 = arith.mulf %87, %111 : vector<8x128xf32>
    %113 = vector.broadcast %110 : vector<8x1xf32> to vector<8x128xf32>
    %114 = arith.addf %112, %113 : vector<8x128xf32>
    %115 = arith.addf %114, %3 : vector<8x128xf32>
    %c0_32 = arith.constant 0 : index
    %c0_33 = arith.constant 0 : index
    %c0_34 = arith.constant 0 : index
    %116 = vector.load %arg7[%c0_32, %c0_33, %c0_34] : memref<1x8x8xf32, #tpu.memory_space<vmem>>, vector<1x8x8xf32>
    %117 = vector.shape_cast %116 : vector<1x8x8xf32> to vector<8x8xf32>
    %cst_35 = arith.constant dense<0.000000e+00> : vector<8x128xf32>
    %118 = tpu.matmul %117, %115, %cst_35 {dimension_numbers = #tpu.dot_dimension_numbers<[1], [0], [0], [1], [0, 0, 1, 1], [], []>} : vector<8x8xf32>, vector<8x128xf32>, vector<8x128xf32> -> vector<8x128xf32>
    %c0_36 = arith.constant 0 : index
    %c0_37 = arith.constant 0 : index
    %c0_38 = arith.constant 0 : index
    %119 = vector.load %arg8[%c0_36, %c0_37, %c0_38] : memref<1x8x1xf32, #tpu.memory_space<vmem>>, vector<1x8x1xf32>
    %120 = vector.shape_cast %119 : vector<1x8x1xf32> to vector<8x1xf32>
    %121 = vector.broadcast %120 : vector<8x1xf32> to vector<8x128xf32>
    %122 = arith.addf %118, %121 : vector<8x128xf32>
    %cst_39 = arith.constant 5.000000e-01 : f32
    %123 = vector.broadcast %cst_39 : f32 to vector<8x128xf32>
    %124 = arith.mulf %123, %122 : vector<8x128xf32>
    %cst_40 = arith.constant 0.707106769 : f32
    %125 = vector.broadcast %cst_40 : f32 to vector<8x128xf32>
    %126 = arith.mulf %122, %125 : vector<8x128xf32>
    %127 = math.erf %126 : vector<8x128xf32>
    %cst_41 = arith.constant 1.000000e+00 : f32
    %128 = vector.broadcast %cst_41 : f32 to vector<8x128xf32>
    %129 = arith.addf %128, %127 : vector<8x128xf32>
    %130 = arith.mulf %124, %129 : vector<8x128xf32>
    %cst_42 = arith.constant dense<0.000000e+00> : vector<8xf32>
    %131 = vector.multi_reduction <add>, %130, %cst_42 [1] : vector<8x128xf32> to vector<8xf32>
    %132 = vector.shape_cast %131 : vector<8xf32> to vector<8x1xf32>
    %133 = arith.mulf %130, %130 : vector<8x128xf32>
    %cst_43 = arith.constant dense<0.000000e+00> : vector<8xf32>
    %134 = vector.multi_reduction <add>, %133, %cst_43 [1] : vector<8x128xf32> to vector<8xf32>
    %135 = vector.shape_cast %134 : vector<8xf32> to vector<8x1xf32>
    %c0_44 = arith.constant 0 : index
    %c0_45 = arith.constant 0 : index
    %c0_46 = arith.constant 0 : index
    %136 = vector.load %arg9[%c0_44, %c0_45, %c0_46] : memref<1x8x1xf32, #tpu.memory_space<vmem>>, vector<1x8x1xf32>
    %137 = vector.shape_cast %136 : vector<1x8x1xf32> to vector<8x1xf32>
    %c0_47 = arith.constant 0 : index
    %c0_48 = arith.constant 0 : index
    %c0_49 = arith.constant 0 : index
    %138 = vector.load %arg10[%c0_47, %c0_48, %c0_49] : memref<1x8x1xf32, #tpu.memory_space<vmem>>, vector<1x8x1xf32>
    %139 = vector.shape_cast %138 : vector<1x8x1xf32> to vector<8x1xf32>
    %cst_50 = arith.constant 7.812500e-03 : f32
    %140 = vector.broadcast %cst_50 : f32 to vector<8x1xf32>
    %141 = arith.mulf %132, %140 : vector<8x1xf32>
    %cst_51 = arith.constant 7.812500e-03 : f32
    %142 = vector.broadcast %cst_51 : f32 to vector<8x1xf32>
    %143 = arith.mulf %135, %142 : vector<8x1xf32>
    %144 = arith.mulf %141, %141 : vector<8x1xf32>
    %145 = arith.subf %143, %144 : vector<8x1xf32>
    %cst_52 = arith.constant 0.000000e+00 : f32
    %146 = vector.broadcast %cst_52 : f32 to vector<8x1xf32>
    %147 = arith.maximumf %145, %146 : vector<8x1xf32>
    %cst_53 = arith.constant 9.99999974E-6 : f32
    %148 = vector.broadcast %cst_53 : f32 to vector<8x1xf32>
    %149 = arith.addf %147, %148 : vector<8x1xf32>
    %150 = math.rsqrt %149 : vector<8x1xf32>
    %151 = arith.mulf %150, %137 : vector<8x1xf32>
    %152 = arith.mulf %141, %151 : vector<8x1xf32>
    %153 = arith.subf %139, %152 : vector<8x1xf32>
    %154 = vector.broadcast %151 : vector<8x1xf32> to vector<8x128xf32>
    %155 = arith.mulf %130, %154 : vector<8x128xf32>
    %156 = vector.broadcast %153 : vector<8x1xf32> to vector<8x128xf32>
    %157 = arith.addf %155, %156 : vector<8x128xf32>
    %c0_54 = arith.constant 0 : index
    %c0_55 = arith.constant 0 : index
    %158 = vector.load %arg11[%c0_54, %c0_55] : memref<8x128xf32, #tpu.memory_space<vmem>>, vector<8x128xf32>
    tpu.vector_store %arg11[%c0_54, %c0_55], %157 {strides = array<i32>} : memref<8x128xf32, #tpu.memory_space<vmem>>, vector<8x128xf32>,
    return
  }
  func.func @transform_0(%arg0: i32) -> (i32, i32) {
    %c0_i32 = arith.constant 0 : i32
    %c0_i32_0 = arith.constant 0 : i32
    %c0_i32_1 = arith.constant 0 : i32
    return %c0_i32, %c0_i32_0 : i32, i32
  }
  func.func @transform_1(%arg0: i32) -> (i32, i32) {
    %c0_i32 = arith.constant 0 : i32
    %c0_i32_0 = arith.constant 0 : i32
    %c0_i32_1 = arith.constant 0 : i32
    return %c0_i32, %c0_i32_0 : i32, i32
  }
  func.func @transform_2(%arg0: i32) -> (i32, i32, i32) {
    %c0_i32 = arith.constant 0 : i32
    %c0_i32_0 = arith.constant 0 : i32
    %c0_i32_1 = arith.constant 0 : i32
    return %arg0, %c0_i32, %c0_i32_0 : i32, i32, i32
  }
  func.func @transform_3(%arg0: i32) -> (i32, i32, i32) {
    %c0_i32 = arith.constant 0 : i32
    %c0_i32_0 = arith.constant 0 : i32
    %c0_i32_1 = arith.constant 0 : i32
    return %arg0, %c0_i32, %c0_i32_0 : i32, i32, i32
  }
  func.func @transform_4(%arg0: i32) -> (i32, i32, i32) {
    %c0_i32 = arith.constant 0 : i32
    %c0_i32_0 = arith.constant 0 : i32
    %c0_i32_1 = arith.constant 0 : i32
    return %arg0, %c0_i32, %c0_i32_0 : i32, i32, i32
  }
  func.func @transform_5(%arg0: i32) -> (i32, i32, i32) {
    %c0_i32 = arith.constant 0 : i32
    %c0_i32_0 = arith.constant 0 : i32
    %c0_i32_1 = arith.constant 0 : i32
    return %arg0, %c0_i32, %c0_i32_0 : i32, i32, i32
  }
  func.func @transform_6(%arg0: i32) -> (i32, i32, i32) {
    %c0_i32 = arith.constant 0 : i32
    %c0_i32_0 = arith.constant 0 : i32
    %c0_i32_1 = arith.constant 0 : i32
    return %arg0, %c0_i32, %c0_i32_0 : i32, i32, i32
  }
  func.func @transform_7(%arg0: i32) -> (i32, i32, i32) {
    %c0_i32 = arith.constant 0 : i32
    %c0_i32_0 = arith.constant 0 : i32
    %c0_i32_1 = arith.constant 0 : i32
    return %arg0, %c0_i32, %c0_i32_0 : i32, i32, i32
  }
  func.func @transform_8(%arg0: i32) -> (i32, i32, i32) {
    %c0_i32 = arith.constant 0 : i32
    %c0_i32_0 = arith.constant 0 : i32
    %c0_i32_1 = arith.constant 0 : i32
    return %arg0, %c0_i32, %c0_i32_0 : i32, i32, i32
  }
  func.func @transform_9(%arg0: i32) -> (i32, i32, i32) {
    %c0_i32 = arith.constant 0 : i32
    %c0_i32_0 = arith.constant 0 : i32
    %c0_i32_1 = arith.constant 0 : i32
    return %arg0, %c0_i32, %c0_i32_0 : i32, i32, i32
  }
  func.func @transform_10(%arg0: i32) -> (i32, i32) {
    %c0_i32 = arith.constant 0 : i32
    %c0_i32_0 = arith.constant 0 : i32
    %c0_i32_1 = arith.constant 0 : i32
    return %c0_i32, %c0_i32_0 : i32, i32
  }
}

</mosaic_0001>

<llo_original>
// kernel: tpu_custom_call.1
$region0: #{tpu_custom_call.1}
  #allocation0 [shape = 'u32[]', space=smem, size = 0x4, offset = 0x4, fixed_abs, tag = 'smem constant byte address 0x4 - core index']
  #allocation1 [shape = 'u32[144,128]{1,0:T(1,128)}', space=vmem, size = 0x12000, scoped, tag = 'internal scratch']
  %s0 = inlined_call_operand.vmem [shape: f32[8,128], index: 0, kind: input, shape index: {}]
  %s1 = inlined_call_operand.vmem [shape: f32[9,128], index: 1, kind: input, shape index: {}]
  %s2 = inlined_call_operand.vmem [shape: f32[2,8,9], index: 2, kind: input, shape index: {}]
  %s3 = inlined_call_operand.vmem [shape: f32[2,8,1], index: 3, kind: input, shape index: {}]
  %s4 = inlined_call_operand.vmem [shape: f32[2,8,1], index: 4, kind: input, shape index: {}]
  %s5 = inlined_call_operand.vmem [shape: f32[2,8,1], index: 5, kind: input, shape index: {}]
  %s6 = inlined_call_operand.vmem [shape: f32[2,8,8], index: 6, kind: input, shape index: {}]
  %s7 = inlined_call_operand.vmem [shape: f32[2,8,1], index: 7, kind: input, shape index: {}]
  %s8 = inlined_call_operand.vmem [shape: f32[2,8,1], index: 8, kind: input, shape index: {}]
  %s9 = inlined_call_operand.vmem [shape: f32[2,8,1], index: 9, kind: input, shape index: {}]
  %s10 = inlined_call_operand.hbm [shape: f32[8,128], index: 10, kind: output, shape index: {}]
  %s11 = sld [smem:[#allocation0]]
  $region77: #{tpu_custom_call.1} parent=0
    _
  %s13 = ssub.s32 1, %s11
  %s14 = scalar_select 0, %s13, %s11
  $region1: #{tpu_custom_call.1} parent=0
    #allocation2 [shape = 'u8[4096]{0}', space=vmem, size = 0x1000, scoped, tag = 'output window, operand 0, single buffered']
    #allocation3 [shape = 's32[2]{0}', space=sflag, size = 0x8, scoped, tag = 'scoped memory for tpu_custom_call.1']
    %15 = vsyncpa [#allocation3], 0
    loop: start=0, step=1, limit=4
    $region2: #{tpu_custom_call.1} parent=1 // loop_pre_header
      _
    $region3: #{tpu_custom_call.1} parent=1 // loop_header
      %s17 = sphi 0, %s21
      %p18 = scmp.ge.s32.totalorder %s17, 4
      %s25 = sphi 0, %s25
      %s27 = sphi 0, %s25
      %s28 = sphi 0, %s27
      %s42 = sphi 0, %s28
      %s46 = sphi 0, %s46
      %s48 = sphi 0, %s46
      %s49 = sphi 0, %s48
      %s63 = sphi 0, %s49
      %s69 = sphi 0, %s71
      %s72 = sphi 0, %s69
      %s73 = sphi 0, %s72
      %s89 = sphi 0, %s73
      %s95 = sphi 0, %s97
      %s98 = sphi 0, %s95
      %s99 = sphi 0, %s98
      %s115 = sphi 0, %s99
      %s121 = sphi 0, %s123
      %s124 = sphi 0, %s121
      %s125 = sphi 0, %s124
      %s141 = sphi 0, %s125
      %s147 = sphi 0, %s149
      %s150 = sphi 0, %s147
      %s151 = sphi 0, %s150
      %s167 = sphi 0, %s151
      %s173 = sphi 0, %s175
      %s176 = sphi 0, %s173
      %s177 = sphi 0, %s176
      %s193 = sphi 0, %s177
      %s199 = sphi 0, %s201
      %s202 = sphi 0, %s199
      %s203 = sphi 0, %s202
      %s219 = sphi 0, %s203
      %s225 = sphi 0, %s227
      %s228 = sphi 0, %s225
      %s229 = sphi 0, %s228
      %s245 = sphi 0, %s229
      %s251 = sphi 0, %s253
      %s254 = sphi 0, %s251
      %s255 = sphi 0, %s254
      %s271 = sphi 0, %s255
      %s275 = sphi 0, %s275
      %s277 = sphi 0, %s275
      %s278 = sphi 0, %s277
      %s292 = sphi 0, %s278
    $region4: #{tpu_custom_call.1} parent=1 // loop_header_branch
      %20 = sbr.rel (%p18) target = $region8
    $region5: #{tpu_custom_call.1} parent=1 // loop_body
      %s22 = ssub.s32 %s17, 1
      %s23 = ssub.s32 %s17, 2
      %s24 = sadd.s32 %s17, 1
      %s26 = sadd.s32 %s25, 1
      %p29 = scmp.eq.s32.totalorder %s17, 1
      %p30 = scmp.ne.s32.totalorder %s25, %s27
      %p31 = scmp.eq.s32.totalorder %s17, 0
      %p32 = por %p30, %p31
      %p33 = scmp.ne.s32.totalorder %s25, %s27
      %p34 = scmp.eq.s32.totalorder %s22, 1
      %p35 = por %p33, %p34
      %p36 = scmp.ne.s32.totalorder %s27, %s28
      %p37 = scmp.eq.s32.totalorder %s22, 0
      %p38 = por %p36, %p37
      %p39 = scmp.ne.s32.totalorder %s27, %s28
      %p40 = scmp.eq.s32.totalorder %s23, 1
      %p41 = por %p39, %p40
      %p43 = scmp.ne.s32.totalorder %s28, %s42
      %p44 = scmp.eq.s32.totalorder %s23, 0
      %p45 = por %p43, %p44
      %s47 = sadd.s32 %s46, 1
      %p50 = scmp.eq.s32.totalorder %s17, 1
      %p51 = scmp.ne.s32.totalorder %s46, %s48
      %p52 = scmp.eq.s32.totalorder %s17, 0
      %p53 = por %p51, %p52
      %p54 = scmp.ne.s32.totalorder %s46, %s48
      %p55 = scmp.eq.s32.totalorder %s22, 1
      %p56 = por %p54, %p55
      %p57 = scmp.ne.s32.totalorder %s48, %s49
      %p58 = scmp.eq.s32.totalorder %s22, 0
      %p59 = por %p57, %p58
      %p60 = scmp.ne.s32.totalorder %s48, %s49
      %p61 = scmp.eq.s32.totalorder %s23, 1
      %p62 = por %p60, %p61
      %p64 = scmp.ne.s32.totalorder %s49, %s63
      %p65 = scmp.eq.s32.totalorder %s23, 0
      %p66 = por %p64, %p65
      %s67 = ssub.s32 %s17, %s24
      %p68 = scmp.eq.s32.totalorder %s67, 0
      %s70 = sadd.s32 %s69, 1
      %s71 = scalar_select %p68, %s69, %s70
      %p74 = pneg %p68
      %p75 = scmp.eq.s32.totalorder %s17, 1
      %p76 = por %p74, %p75
      %p77 = scmp.ne.s32.totalorder %s69, %s72
      %p78 = scmp.eq.s32.totalorder %s17, 0
      %p79 = por %p77, %p78
      %p80 = scmp.ne.s32.totalorder %s69, %s72
      %p81 = scmp.eq.s32.totalorder %s22, 1
      %p82 = por %p80, %p81
      %p83 = scmp.ne.s32.totalorder %s72, %s73
      %p84 = scmp.eq.s32.totalorder %s22, 0
      %p85 = por %p83, %p84
      %p86 = scmp.ne.s32.totalorder %s72, %s73
      %p87 = scmp.eq.s32.totalorder %s23, 1
      %p88 = por %p86, %p87
      %p90 = scmp.ne.s32.totalorder %s73, %s89
      %p91 = scmp.eq.s32.totalorder %s23, 0
      %p92 = por %p90, %p91
      %s93 = ssub.s32 %s17, %s24
      %p94 = scmp.eq.s32.totalorder %s93, 0
      %s96 = sadd.s32 %s95, 1
      %s97 = scalar_select %p94, %s95, %s96
      %p100 = pneg %p94
      %p101 = scmp.eq.s32.totalorder %s17, 1
      %p102 = por %p100, %p101
      %p103 = scmp.ne.s32.totalorder %s95, %s98
      %p104 = scmp.eq.s32.totalorder %s17, 0
      %p105 = por %p103, %p104
      %p106 = scmp.ne.s32.totalorder %s95, %s98
      %p107 = scmp.eq.s32.totalorder %s22, 1
      %p108 = por %p106, %p107
      %p109 = scmp.ne.s32.totalorder %s98, %s99
      %p110 = scmp.eq.s32.totalorder %s22, 0
      %p111 = por %p109, %p110
      %p112 = scmp.ne.s32.totalorder %s98, %s99
      %p113 = scmp.eq.s32.totalorder %s23, 1
      %p114 = por %p112, %p113
      %p116 = scmp.ne.s32.totalorder %s99, %s115
      %p117 = scmp.eq.s32.totalorder %s23, 0
      %p118 = por %p116, %p117
      %s119 = ssub.s32 %s17, %s24
      %p120 = scmp.eq.s32.totalorder %s119, 0
      %s122 = sadd.s32 %s121, 1
      %s123 = scalar_select %p120, %s121, %s122
      %p126 = pneg %p120
      %p127 = scmp.eq.s32.totalorder %s17, 1
      %p128 = por %p126, %p127
      %p129 = scmp.ne.s32.totalorder %s121, %s124
      %p130 = scmp.eq.s32.totalorder %s17, 0
      %p131 = por %p129, %p130
      %p132 = scmp.ne.s32.totalorder %s121, %s124
      %p133 = scmp.eq.s32.totalorder %s22, 1
      %p134 = por %p132, %p133
      %p135 = scmp.ne.s32.totalorder %s124, %s125
      %p136 = scmp.eq.s32.totalorder %s22, 0
      %p137 = por %p135, %p136
      %p138 = scmp.ne.s32.totalorder %s124, %s125
      %p139 = scmp.eq.s32.totalorder %s23, 1
      %p140 = por %p138, %p139
      %p142 = scmp.ne.s32.totalorder %s125, %s141
      %p143 = scmp.eq.s32.totalorder %s23, 0
      %p144 = por %p142, %p143
      %s145 = ssub.s32 %s17, %s24
      %p146 = scmp.eq.s32.totalorder %s145, 0
      %s148 = sadd.s32 %s147, 1
      %s149 = scalar_select %p146, %s147, %s148
      %p152 = pneg %p146
      %p153 = scmp.eq.s32.totalorder %s17, 1
      %p154 = por %p152, %p153
      %p155 = scmp.ne.s32.totalorder %s147, %s150
      %p156 = scmp.eq.s32.totalorder %s17, 0
      %p157 = por %p155, %p156
      %p158 = scmp.ne.s32.totalorder %s147, %s150
      %p159 = scmp.eq.s32.totalorder %s22, 1
      %p160 = por %p158, %p159
      %p161 = scmp.ne.s32.totalorder %s150, %s151
      %p162 = scmp.eq.s32.totalorder %s22, 0
      %p163 = por %p161, %p162
      %p164 = scmp.ne.s32.totalorder %s150, %s151
      %p165 = scmp.eq.s32.totalorder %s23, 1
      %p166 = por %p164, %p165
      %p168 = scmp.ne.s32.totalorder %s151, %s167
      %p169 = scmp.eq.s32.totalorder %s23, 0
      %p170 = por %p168, %p169
      %s171 = ssub.s32 %s17, %s24
      %p172 = scmp.eq.s32.totalorder %s171, 0
      %s174 = sadd.s32 %s173, 1
      %s175 = scalar_select %p172, %s173, %s174
      %p178 = pneg %p172
      %p179 = scmp.eq.s32.totalorder %s17, 1
      %p180 = por %p178, %p179
      %p181 = scmp.ne.s32.totalorder %s173, %s176
      %p182 = scmp.eq.s32.totalorder %s17, 0
      %p183 = por %p181, %p182
      %p184 = scmp.ne.s32.totalorder %s173, %s176
      %p185 = scmp.eq.s32.totalorder %s22, 1
      %p186 = por %p184, %p185
      %p187 = scmp.ne.s32.totalorder %s176, %s177
      %p188 = scmp.eq.s32.totalorder %s22, 0
      %p189 = por %p187, %p188
      %p190 = scmp.ne.s32.totalorder %s176, %s177
      %p191 = scmp.eq.s32.totalorder %s23, 1
      %p192 = por %p190, %p191
      %p194 = scmp.ne.s32.totalorder %s177, %s193
      %p195 = scmp.eq.s32.totalorder %s23, 0
      %p196 = por %p194, %p195
      %s197 = ssub.s32 %s17, %s24
      %p198 = scmp.eq.s32.totalorder %s197, 0
      %s200 = sadd.s32 %s199, 1
      %s201 = scalar_select %p198, %s199, %s200
      %p204 = pneg %p198
      %p205 = scmp.eq.s32.totalorder %s17, 1
      %p206 = por %p204, %p205
      %p207 = scmp.ne.s32.totalorder %s199, %s202
      %p208 = scmp.eq.s32.totalorder %s17, 0
      %p209 = por %p207, %p208
      %p210 = scmp.ne.s32.totalorder %s199, %s202
      %p211 = scmp.eq.s32.totalorder %s22, 1
      %p212 = por %p210, %p211
      %p213 = scmp.ne.s32.totalorder %s202, %s203
      %p214 = scmp.eq.s32.totalorder %s22, 0
      %p215 = por %p213, %p214
      %p216 = scmp.ne.s32.totalorder %s202, %s203
      %p217 = scmp.eq.s32.totalorder %s23, 1
      %p218 = por %p216, %p217
      %p220 = scmp.ne.s32.totalorder %s203, %s219
      %p221 = scmp.eq.s32.totalorder %s23, 0
      %p222 = por %p220, %p221
      %s223 = ssub.s32 %s17, %s24
      %p224 = scmp.eq.s32.totalorder %s223, 0
      %s226 = sadd.s32 %s225, 1
      %s227 = scalar_select %p224, %s225, %s226
      %p230 = pneg %p224
      %p231 = scmp.eq.s32.totalorder %s17, 1
      %p232 = por %p230, %p231
      %p233 = scmp.ne.s32.totalorder %s225, %s228
      %p234 = scmp.eq.s32.totalorder %s17, 0
      %p235 = por %p233, %p234
      %p236 = scmp.ne.s32.totalorder %s225, %s228
      %p237 = scmp.eq.s32.totalorder %s22, 1
      %p238 = por %p236, %p237
      %p239 = scmp.ne.s32.totalorder %s228, %s229
      %p240 = scmp.eq.s32.totalorder %s22, 0
      %p241 = por %p239, %p240
      %p242 = scmp.ne.s32.totalorder %s228, %s229
      %p243 = scmp.eq.s32.totalorder %s23, 1
      %p244 = por %p242, %p243
      %p246 = scmp.ne.s32.totalorder %s229, %s245
      %p247 = scmp.eq.s32.totalorder %s23, 0
      %p248 = por %p246, %p247
      %s249 = ssub.s32 %s17, %s24
      %p250 = scmp.eq.s32.totalorder %s249, 0
      %s252 = sadd.s32 %s251, 1
      %s253 = scalar_select %p250, %s251, %s252
      %p256 = pneg %p250
      %p257 = scmp.eq.s32.totalorder %s17, 1
      %p258 = por %p256, %p257
      %p259 = scmp.ne.s32.totalorder %s251, %s254
      %p260 = scmp.eq.s32.totalorder %s17, 0
      %p261 = por %p259, %p260
      %p262 = scmp.ne.s32.totalorder %s251, %s254
      %p263 = scmp.eq.s32.totalorder %s22, 1
      %p264 = por %p262, %p263
      %p265 = scmp.ne.s32.totalorder %s254, %s255
      %p266 = scmp.eq.s32.totalorder %s22, 0
      %p267 = por %p265, %p266
      %p268 = scmp.ne.s32.totalorder %s254, %s255
      %p269 = scmp.eq.s32.totalorder %s23, 1
      %p270 = por %p268, %p269
      %p272 = scmp.ne.s32.totalorder %s255, %s271
      %p273 = scmp.eq.s32.totalorder %s23, 0
      %p274 = por %p272, %p273
      %s276 = sadd.s32 %s275, 1
      %p279 = scmp.eq.s32.totalorder %s17, 1
      %p280 = scmp.ne.s32.totalorder %s275, %s277
      %p281 = scmp.eq.s32.totalorder %s17, 0
      %p282 = por %p280, %p281
      %p283 = scmp.ne.s32.totalorder %s275, %s277
      %p284 = scmp.eq.s32.totalorder %s22, 1
      %p285 = por %p283, %p284
      %p286 = scmp.ne.s32.totalorder %s277, %s278
      %p287 = scmp.eq.s32.totalorder %s22, 0
      %p288 = por %p286, %p287
      %p289 = scmp.ne.s32.totalorder %s277, %s278
      %p290 = scmp.eq.s32.totalorder %s23, 1
      %p291 = por %p289, %p290
      %p293 = scmp.ne.s32.totalorder %s278, %s292
      %p294 = scmp.eq.s32.totalorder %s23, 0
      %p295 = por %p293, %p294
      %p296 = scmp.le.s32.totalorder 1, %s17
      %p297 = scmp.lt.s32.totalorder %s17, 3
      %p298 = pnand %p296, %p297
      %p299 = pneg %p298
      // Predicated region
      $region9: #{tpu_custom_call.1} parent=5 // pred_check
        _
      $region10: #{tpu_custom_call.1} parent=5 // pred_check_branch
        %301 = sbr.rel (%p298) target = $region12
      $region11: #{tpu_custom_call.1} parent=5 // pred_region
        %s302 = ssub.s32 %s17, 1
        // Predicated region
        $region13: #{tpu_custom_call.1} parent=11 // pred_check
          %p303 = pneg %p38
        $region14: #{tpu_custom_call.1} parent=11 // pred_check_branch
          %305 = sbr.rel (%p303) target = $region16
        $region15: #{tpu_custom_call.1} parent=11 // pred_region
          _
        $region16: #{tpu_custom_call.1} parent=11 // pred_fallthru
          _
        // Predicated region
        $region17: #{tpu_custom_call.1} parent=11 // pred_check
          %p306 = pneg %p59
        $region18: #{tpu_custom_call.1} parent=11 // pred_check_branch
          %308 = sbr.rel (%p306) target = $region20
        $region19: #{tpu_custom_call.1} parent=11 // pred_region
          _
        $region20: #{tpu_custom_call.1} parent=11 // pred_fallthru
          _
      $region12: #{tpu_custom_call.1} parent=5 // pred_fallthru
        _
      %p309 = scmp.lt.s32.totalorder %s17, 2
      // Predicated region
      $region21: #{tpu_custom_call.1} parent=5 // pred_check
        %p310 = pneg %p309
      $region22: #{tpu_custom_call.1} parent=5 // pred_check_branch
        %312 = sbr.rel (%p310) target = $region24
      $region23: #{tpu_custom_call.1} parent=5 // pred_region
        // Predicated region
        $region25: #{tpu_custom_call.1} parent=23 // pred_check
          %p313 = pneg %p79
        $region26: #{tpu_custom_call.1} parent=23 // pred_check_branch
          %315 = sbr.rel (%p313) target = $region28
        $region27: #{tpu_custom_call.1} parent=23 // pred_region
          %p316 = scmp.lt.s32.totalorder %s17, 1
          %s317 = scalar_select %p316, %s17, 1
          %s318 = smul.addr %s317, 8
          %s319 = scalar_lea.vmem %s2, %s318
        $region28: #{tpu_custom_call.1} parent=23 // pred_fallthru
          _
        // Predicated region
        $region29: #{tpu_custom_call.1} parent=23 // pred_check
          %p320 = pneg %p105
        $region30: #{tpu_custom_call.1} parent=23 // pred_check_branch
          %322 = sbr.rel (%p320) target = $region32
        $region31: #{tpu_custom_call.1} parent=23 // pred_region
          %p323 = scmp.lt.s32.totalorder %s17, 1
          %s324 = scalar_select %p323, %s17, 1
          %s325 = smul.addr %s324, 8
          %s326 = scalar_lea.vmem %s3, %s325
        $region32: #{tpu_custom_call.1} parent=23 // pred_fallthru
          _
        // Predicated region
        $region33: #{tpu_custom_call.1} parent=23 // pred_check
          %p327 = pneg %p131
        $region34: #{tpu_custom_call.1} parent=23 // pred_check_branch
          %329 = sbr.rel (%p327) target = $region36
        $region35: #{tpu_custom_call.1} parent=23 // pred_region
          %p330 = scmp.lt.s32.totalorder %s17, 1
          %s331 = scalar_select %p330, %s17, 1
          %s332 = smul.addr %s331, 8
          %s333 = scalar_lea.vmem %s4, %s332
        $region36: #{tpu_custom_call.1} parent=23 // pred_fallthru
          _
        // Predicated region
        $region37: #{tpu_custom_call.1} parent=23 // pred_check
          %p334 = pneg %p157
        $region38: #{tpu_custom_call.1} parent=23 // pred_check_branch
          %336 = sbr.rel (%p334) target = $region40
        $region39: #{tpu_custom_call.1} parent=23 // pred_region
          %p337 = scmp.lt.s32.totalorder %s17, 1
          %s338 = scalar_select %p337, %s17, 1
          %s339 = smul.addr %s338, 8
          %s340 = scalar_lea.vmem %s5, %s339
        $region40: #{tpu_custom_call.1} parent=23 // pred_fallthru
          _
        // Predicated region
        $region41: #{tpu_custom_call.1} parent=23 // pred_check
          %p341 = pneg %p183
        $region42: #{tpu_custom_call.1} parent=23 // pred_check_branch
          %343 = sbr.rel (%p341) target = $region44
        $region43: #{tpu_custom_call.1} parent=23 // pred_region
          %p344 = scmp.lt.s32.totalorder %s17, 1
          %s345 = scalar_select %p344, %s17, 1
          %s346 = smul.addr %s345, 8
          %s347 = scalar_lea.vmem %s6, %s346
        $region44: #{tpu_custom_call.1} parent=23 // pred_fallthru
          _
        // Predicated region
        $region45: #{tpu_custom_call.1} parent=23 // pred_check
          %p348 = pneg %p209
        $region46: #{tpu_custom_call.1} parent=23 // pred_check_branch
          %350 = sbr.rel (%p348) target = $region48
        $region47: #{tpu_custom_call.1} parent=23 // pred_region
          %p351 = scmp.lt.s32.totalorder %s17, 1
          %s352 = scalar_select %p351, %s17, 1
          %s353 = smul.addr %s352, 8
          %s354 = scalar_lea.vmem %s7, %s353
        $region48: #{tpu_custom_call.1} parent=23 // pred_fallthru
          _
        // Predicated region
        $region49: #{tpu_custom_call.1} parent=23 // pred_check
          %p355 = pneg %p235
        $region50: #{tpu_custom_call.1} parent=23 // pred_check_branch
          %357 = sbr.rel (%p355) target = $region52
        $region51: #{tpu_custom_call.1} parent=23 // pred_region
          %p358 = scmp.lt.s32.totalorder %s17, 1
          %s359 = scalar_select %p358, %s17, 1
          %s360 = smul.addr %s359, 8
          %s361 = scalar_lea.vmem %s8, %s360
        $region52: #{tpu_custom_call.1} parent=23 // pred_fallthru
          _
        // Predicated region
        $region53: #{tpu_custom_call.1} parent=23 // pred_check
          %p362 = pneg %p261
        $region54: #{tpu_custom_call.1} parent=23 // pred_check_branch
          %364 = sbr.rel (%p362) target = $region56
        $region55: #{tpu_custom_call.1} parent=23 // pred_region
          %p365 = scmp.lt.s32.totalorder %s17, 1
          %s366 = scalar_select %p365, %s17, 1
          %s367 = smul.addr %s366, 8
          %s368 = scalar_lea.vmem %s9, %s367
        $region56: #{tpu_custom_call.1} parent=23 // pred_fallthru
          _
      $region24: #{tpu_custom_call.1} parent=5 // pred_fallthru
        _
      %p369 = scmp.le.s32.totalorder 1, %s17
      %p370 = scmp.lt.s32.totalorder %s17, 3
      %p371 = pnand %p369, %p370
      %p372 = pneg %p371
      // Predicated region
      $region57: #{tpu_custom_call.1} parent=5 // pred_check
        _
      $region58: #{tpu_custom_call.1} parent=5 // pred_check_branch
        %374 = sbr.rel (%p371) target = $region60
      $region59: #{tpu_custom_call.1} parent=5 // pred_region
        %s375 = ssub.s32 %s17, 1
        %p376 = pneg %p38
        %p377 = pneg %p35
        %p378 = pneg %p59
        %p379 = pneg %p56
        %p380 = scmp.lt.s32.totalorder %s22, 1
        %s381 = scalar_select %p380, %s22, 1
        %s382 = smul.addr %s381, 8
        %s383 = scalar_lea.vmem %s2, %s382
        %p384 = pneg %p85
        %p385 = pneg %p82
        %p386 = scmp.lt.s32.totalorder %s22, 1
        %s387 = scalar_select %p386, %s22, 1
        %s388 = smul.addr %s387, 8
        %s389 = scalar_lea.vmem %s3, %s388
        %p390 = pneg %p111
        %p391 = pneg %p108
        %p392 = scmp.lt.s32.totalorder %s22, 1
        %s393 = scalar_select %p392, %s22, 1
        %s394 = smul.addr %s393, 8
        %s395 = scalar_lea.vmem %s4, %s394
        %p396 = pneg %p137
        %p397 = pneg %p134
        %p398 = scmp.lt.s32.totalorder %s22, 1
        %s399 = scalar_select %p398, %s22, 1
        %s400 = smul.addr %s399, 8
        %s401 = scalar_lea.vmem %s5, %s400
        %p402 = pneg %p163
        %p403 = pneg %p160
        %p404 = scmp.lt.s32.totalorder %s22, 1
        %s405 = scalar_select %p404, %s22, 1
        %s406 = smul.addr %s405, 8
        %s407 = scalar_lea.vmem %s6, %s406
        %p408 = pneg %p189
        %p409 = pneg %p186
        %p410 = scmp.lt.s32.totalorder %s22, 1
        %s411 = scalar_select %p410, %s22, 1
        %s412 = smul.addr %s411, 8
        %s413 = scalar_lea.vmem %s7, %s412
        %p414 = pneg %p215
        %p415 = pneg %p212
        %p416 = scmp.lt.s32.totalorder %s22, 1
        %s417 = scalar_select %p416, %s22, 1
        %s418 = smul.addr %s417, 8
        %s419 = scalar_lea.vmem %s8, %s418
        %p420 = pneg %p241
        %p421 = pneg %p238
        %p422 = scmp.lt.s32.totalorder %s22, 1
        %s423 = scalar_select %p422, %s22, 1
        %s424 = smul.addr %s423, 8
        %s425 = scalar_lea.vmem %s9, %s424
        %p426 = pneg %p267
        %p427 = pneg %p264
        %p428 = pneg %p288
        %p429 = pneg %p285
        %p430 = scmp.lt.s32.totalorder %s22, 1
        %s431 = scalar_select %p430, %s22, 1
        %s432 = smul.addr %s431, 8
        %s433 = scalar_lea.vmem %s2, %s432
        %p434 = scmp.lt.s32.totalorder %s22, 1
        %s435 = scalar_select %p434, %s22, 1
        %s436 = smul.addr %s435, 8
        %s437 = scalar_lea.vmem %s3, %s436
        %p438 = scmp.lt.s32.totalorder %s22, 1
        %s439 = scalar_select %p438, %s22, 1
        %s440 = smul.addr %s439, 8
        %s441 = scalar_lea.vmem %s4, %s440
        %p442 = scmp.lt.s32.totalorder %s22, 1
        %s443 = scalar_select %p442, %s22, 1
        %s444 = smul.addr %s443, 8
        %s445 = scalar_lea.vmem %s5, %s444
        %p446 = scmp.lt.s32.totalorder %s22, 1
        %s447 = scalar_select %p446, %s22, 1
        %s448 = smul.addr %s447, 8
        %s449 = scalar_lea.vmem %s6, %s448
        %p450 = scmp.lt.s32.totalorder %s22, 1
        %s451 = scalar_select %p450, %s22, 1
        %s452 = smul.addr %s451, 8
        %s453 = scalar_lea.vmem %s7, %s452
        %p454 = scmp.lt.s32.totalorder %s22, 1
        %s455 = scalar_select %p454, %s22, 1
        %s456 = smul.addr %s455, 8
        %s457 = scalar_lea.vmem %s8, %s456
        %p458 = scmp.lt.s32.totalorder %s22, 1
        %s459 = scalar_select %p458, %s22, 1
        %s460 = smul.addr %s459, 8
        %s461 = scalar_lea.vmem %s9, %s460
        %p462 = scmp.eq.s32.totalorder %s22, 0
        // Predicated region
        $region61: #{tpu_custom_call.1} parent=59 // pred_check
          %p463 = pneg %p462
        $region62: #{tpu_custom_call.1} parent=59 // pred_check_branch
          %465 = sbr.rel (%p463) target = $region64
        $region63: #{tpu_custom_call.1} parent=59 // pred_region
          %v466 = vld [vmem:[%s0] sm:$0xff]
          %467 = vst [vmem:[#allocation2] sm:$0xff] %v466
        $region64: #{tpu_custom_call.1} parent=59 // pred_fallthru
          _
        %v468 = vld [vmem:[#allocation2] sm:$0xff]
        %v469 = vld [vmem:[%s433] sm:$0xff]
        %470 = vrot.lane.b32.xlu0 %v468, 4
        %v471 = vpop.permute.xlu0 %470
        %v472 = vld [vmem:[%s1] sm:$0x1]
        %v473 = vlaneseq
        %v474 = vshrl.u32 %v473, 7
        %v475 = vsub.s32 0, %v474
        %v476 = vrot.slane %v472, %v475
        %v477 = vmul.f32 %v471, %v476
        %479 = vset.pattern.permute.xlu0 0
        %480 = vperm.xlu0 %479, %v469
        %v481 = vpop.permute.xlu0 %480
        %v483 = vmul.f32 %v477, %v481
        %484 = vrot.lane.b32.xlu0 %v468, 3
        %v485 = vpop.permute.xlu0 %484
        %v486 = vld [vmem:[%s1 + $0x1] sm:$0x1]
        %v487 = vlaneseq
        %v488 = vshrl.u32 %v487, 7
        %v489 = vsub.s32 0, %v488
        %v490 = vrot.slane %v486, %v489
        %v491 = vmul.f32 %v485, %v490
        %492 = vset.pattern.permute.xlu0 1
        %493 = vperm.xlu0 %492, %v469
        %v494 = vpop.permute.xlu0 %493
        %v496 = vmul.f32 %v491, %v494
        %v497 = vadd.f32 %v483, %v496
        %498 = vrot.lane.b32.xlu0 %v468, 2
        %v499 = vpop.permute.xlu0 %498
        %v500 = vld [vmem:[%s1 + $0x2] sm:$0x1]
        %v501 = vlaneseq
        %v502 = vshrl.u32 %v501, 7
        %v503 = vsub.s32 0, %v502
        %v504 = vrot.slane %v500, %v503
        %v505 = vmul.f32 %v499, %v504
        %506 = vset.pattern.permute.xlu0 2
        %507 = vperm.xlu0 %506, %v469
        %v508 = vpop.permute.xlu0 %507
        %v510 = vmul.f32 %v505, %v508
        %v511 = vadd.f32 %v497, %v510
        %512 = vrot.lane.b32.xlu0 %v468, 1
        %v513 = vpop.permute.xlu0 %512
        %v514 = vld [vmem:[%s1 + $0x3] sm:$0x1]
        %v515 = vlaneseq
        %v516 = vshrl.u32 %v515, 7
        %v517 = vsub.s32 0, %v516
        %v518 = vrot.slane %v514, %v517
        %v519 = vmul.f32 %v513, %v518
        %520 = vset.pattern.permute.xlu0 3
        %521 = vperm.xlu0 %520, %v469
        %v522 = vpop.permute.xlu0 %521
        %v524 = vmul.f32 %v519, %v522
        %v525 = vadd.f32 %v511, %v524
        %v526 = vld [vmem:[%s1 + $0x4] sm:$0x1]
        %v527 = vlaneseq
        %v528 = vshrl.u32 %v527, 7
        %v529 = vsub.s32 0, %v528
        %v530 = vrot.slane %v526, %v529
        %v531 = vmul.f32 %v468, %v530
        %532 = vset.pattern.permute.xlu0 4
        %533 = vperm.xlu0 %532, %v469
        %v534 = vpop.permute.xlu0 %533
        %v536 = vmul.f32 %v531, %v534
        %v537 = vadd.f32 %v525, %v536
        %538 = vrot.lane.b32.xlu0 %v468, 127
        %v539 = vpop.permute.xlu0 %538
        %v540 = vld [vmem:[%s1 + $0x5] sm:$0x1]
        %v541 = vlaneseq
        %v542 = vshrl.u32 %v541, 7
        %v543 = vsub.s32 0, %v542
        %v544 = vrot.slane %v540, %v543
        %v545 = vmul.f32 %v539, %v544
        %546 = vset.pattern.permute.xlu0 5
        %547 = vperm.xlu0 %546, %v469
        %v548 = vpop.permute.xlu0 %547
        %v550 = vmul.f32 %v545, %v548
        %v551 = vadd.f32 %v537, %v550
        %552 = vrot.lane.b32.xlu0 %v468, 126
        %v553 = vpop.permute.xlu0 %552
        %v554 = vld [vmem:[%s1 + $0x6] sm:$0x1]
        %v555 = vlaneseq
        %v556 = vshrl.u32 %v555, 7
        %v557 = vsub.s32 0, %v556
        %v558 = vrot.slane %v554, %v557
        %v559 = vmul.f32 %v553, %v558
        %560 = vset.pattern.permute.xlu0 6
        %561 = vperm.xlu0 %560, %v469
        %v562 = vpop.permute.xlu0 %561
        %v564 = vmul.f32 %v559, %v562
        %v565 = vadd.f32 %v551, %v564
        %566 = vrot.lane.b32.xlu0 %v468, 125
        %v567 = vpop.permute.xlu0 %566
        %v568 = vld [vmem:[%s1 + $0x7] sm:$0x1]
        %v569 = vlaneseq
        %v570 = vshrl.u32 %v569, 7
        %v571 = vsub.s32 0, %v570
        %v572 = vrot.slane %v568, %v571
        %v573 = vmul.f32 %v567, %v572
        %574 = vset.pattern.permute.xlu0 7
        %575 = vperm.xlu0 %574, %v469
        %v576 = vpop.permute.xlu0 %575
        %v578 = vmul.f32 %v573, %v576
        %v579 = vadd.f32 %v565, %v578
        %580 = vrot.lane.b32.xlu0 %v468, 124
        %v581 = vpop.permute.xlu0 %580
        %v582 = vld [vmem:[%s1 + $0x8] sm:$0x1]
        %v583 = vlaneseq
        %v584 = vshrl.u32 %v583, 7
        %v585 = vsub.s32 0, %v584
        %v586 = vrot.slane %v582, %v585
        %v587 = vmul.f32 %v581, %v586
        %588 = vset.pattern.permute.xlu0 8
        %589 = vperm.xlu0 %588, %v469
        %v590 = vpop.permute.xlu0 %589
        %v592 = vmul.f32 %v587, %v590
        %v593 = vadd.f32 %v579, %v592
        %v594 = vld [vmem:[%s437] sm:$0xff]
        %596 = vset.pattern.permute.xlu0 0
        %597 = vperm.xlu0 %596, %v594
        %v598 = vpop.permute.xlu0 %597
        %v600 = vadd.f32 %v593, %v598
        %v601 = vmul.f32 %v600, 0.5
        %v602 = vmul.f32 %v600, 0.70710677
        %v603 = verf.f32.pop %v602
        %v604 = vadd.f32 %v603, 1.0
        %v605 = vmul.f32 %v601, %v604
        %606 = vadd.xlane.f32.xlu0 %v605
        %v607 = vpop.xlane.xlu0 %606
        %v608 = vmul.f32 %v605, %v605
        %609 = vadd.xlane.f32.xlu0 %v608
        %v610 = vpop.xlane.xlu0 %609
        %v611 = vld [vmem:[%s441] sm:$0xff]
        %v612 = vld [vmem:[%s445] sm:$0xff]
        %v613 = vmul.f32 %v607, 0.0078125
        %v614 = vmul.f32 %v610, 0.0078125
        %v615 = vmul.f32 %v613, %v613
        %v616 = vsub.f32 %v614, %v615
        %v617 = vmax.f32 %v616, 0.0
        %v618 = vadd.f32 %v617, 1e-05
        %v619 = vrsqrt.pop %v618
        %v620 = vmul.f32 %v619, %v611
        %v621 = vmul.f32 %v613, %v620
        %v622 = vsub.f32 %v612, %v621
        %624 = vset.pattern.permute.xlu0 0
        %625 = vperm.xlu0 %624, %v620
        %v626 = vpop.permute.xlu0 %625
        %v628 = vmul.f32 %v605, %v626
        %630 = vset.pattern.permute.xlu0 0
        %631 = vperm.xlu0 %630, %v622
        %v632 = vpop.permute.xlu0 %631
        %v634 = vadd.f32 %v628, %v632
        %v635 = vadd.f32 %v634, %v468
        %v636 = vld [vmem:[%s449] sm:$0xff]
        %v637 = vld [vmem:[%s453] sm:$0xff]
        %639 = vset.pattern.permute.xlu0 0
        %640 = vperm.xlu0 %639, %v637
        %v641 = vpop.permute.xlu0 %640
        %vm643 = vcmask 64512
        %v645 = vsel %vm643, %v636, 0
        %647 = vmatprep.subr.mxu0 0.0
        %648 = vmatpush1.msra.mxu0 %v635
        %649 = vmatprep.subr.mxu0 0.0
        %650 = vmatpush1.msra.mxu0 0.0
        %651 = vmatprep.subr.mxu0 0.0
        %652 = vmatpush1.msra.mxu0 0.0
        %653 = vmatprep.subr.mxu0 0.0
        %654 = vmatpush1.msra.mxu0 0.0
        %655 = vmatprep.subr.mxu0 0.0
        %656 = vmatpush1.msra.mxu0 0.0
        %657 = vmatprep.subr.mxu0 0.0
        %658 = vmatpush1.msra.mxu0 0.0
        %659 = vmatprep.subr.mxu0 0.0
        %660 = vmatpush1.msra.mxu0 0.0
        %661 = vmatprep.subr.mxu0 0.0
        %662 = vmatpush1.msra.mxu0 0.0
        %663 = vmatprep.subr.mxu0 0.0
        %664 = vmatpush1.msra.mxu0 0.0
        %665 = vmatprep.subr.mxu0 0.0
        %666 = vmatpush1.msra.mxu0 0.0
        %667 = vmatprep.subr.mxu0 0.0
        %668 = vmatpush1.msra.mxu0 0.0
        %669 = vmatprep.subr.mxu0 0.0
        %670 = vmatpush1.msra.mxu0 0.0
        %671 = vmatprep.subr.mxu0 0.0
        %672 = vmatpush1.msra.mxu0 0.0
        %673 = vmatprep.subr.mxu0 0.0
        %674 = vmatpush1.msra.mxu0 0.0
        %675 = vmatprep.subr.mxu0 0.0
        %676 = vmatpush1.msra.mxu0 0.0
        %677 = vmatprep.subr.mxu0 0.0
        %678 = vmatpush1.msra.mxu0 0.0
        %679 = vmatprep.subr.mxu0 0.0
        %680 = vmatpush1.msra.mxu0 0.0
        %681 = vmatprep.subr.mxu0 0.0
        %682 = vmatpush1.msra.mxu0 0.0
        %683 = vmatprep.subr.mxu0 0.0
        %684 = vmatpush1.msra.mxu0 0.0
        %685 = vmatprep.subr.mxu0 0.0
        %686 = vmatpush1.msra.mxu0 0.0
        %687 = vmatprep.subr.mxu0 0.0
        %688 = vmatpush1.msra.mxu0 0.0
        %689 = vmatprep.subr.mxu0 0.0
        %690 = vmatpush1.msra.mxu0 0.0
        %691 = vmatprep.subr.mxu0 0.0
        %692 = vmatpush1.msra.mxu0 0.0
        %693 = vmatprep.subr.mxu0 0.0
        %694 = vmatpush1.msra.mxu0 0.0
        %695 = vmatprep.subr.mxu0 0.0
        %696 = vmatpush1.msra.mxu0 0.0
        %697 = vmatprep.subr.mxu0 0.0
        %698 = vmatpush1.msra.mxu0 0.0
        %699 = vmatprep.subr.mxu0 0.0
        %700 = vmatpush1.msra.mxu0 0.0
        %701 = vmatprep.subr.mxu0 0.0
        %702 = vmatpush1.msra.mxu0 0.0
        %703 = vmatprep.subr.mxu0 0.0
        %704 = vmatpush1.msra.mxu0 0.0
        %705 = vmatprep.subr.mxu0 0.0
        %706 = vmatpush1.msra.mxu0 0.0
        %707 = vmatprep.subr.mxu0 0.0
        %708 = vmatpush1.msra.mxu0 0.0
        %709 = vmatprep.subr.mxu0 0.0
        %710 = vmatpush1.msra.mxu0 0.0
        %711 = vmatprep.mubr.f32.mxu0 0.0
        %712 = vmatmul.mubr.f32.gmra.mrb[0].mxu0 %v645
        %v713 = vpop.f32.mrb[0].mxu0
        %v714 = vadd.f32 %v641, %v713
        %v715 = vpop.f32.mrb[0].mxu0
        %716 = vdwg.mxu0
        %v717 = vmul.f32 %v714, 0.5
        %v718 = vmul.f32 %v714, 0.70710677
        %v719 = verf.f32.pop %v718
        %v720 = vadd.f32 %v719, 1.0
        %v721 = vmul.f32 %v717, %v720
        %722 = vadd.xlane.f32.xlu0 %v721
        %v723 = vpop.xlane.xlu0 %722
        %v724 = vmul.f32 %v721, %v721
        %725 = vadd.xlane.f32.xlu0 %v724
        %v726 = vpop.xlane.xlu0 %725
        %v727 = vld [vmem:[%s457] sm:$0xff]
        %v728 = vld [vmem:[%s461] sm:$0xff]
        %v729 = vmul.f32 %v723, 0.0078125
        %v730 = vmul.f32 %v726, 0.0078125
        %v731 = vmul.f32 %v729, %v729
        %v732 = vsub.f32 %v730, %v731
        %v733 = vmax.f32 %v732, 0.0
        %v734 = vadd.f32 %v733, 1e-05
        %v735 = vrsqrt.pop %v734
        %v736 = vmul.f32 %v735, %v727
        %v737 = vmul.f32 %v729, %v736
        %v738 = vsub.f32 %v728, %v737
        %740 = vset.pattern.permute.xlu0 0
        %741 = vperm.xlu0 %740, %v736
        %v742 = vpop.permute.xlu0 %741
        %v744 = vmul.f32 %v721, %v742
        %746 = vset.pattern.permute.xlu0 0
        %747 = vperm.xlu0 %746, %v738
        %v748 = vpop.permute.xlu0 %747
        %v750 = vadd.f32 %v744, %v748
        %751 = vst [vmem:[#allocation2] sm:$0xff] %v750
        // Predicated region
        $region65: #{tpu_custom_call.1} parent=59 // pred_check
          %p752 = pneg %p285
        $region66: #{tpu_custom_call.1} parent=59 // pred_check_branch
          %754 = sbr.rel (%p752) target = $region68
        $region67: #{tpu_custom_call.1} parent=59 // pred_region
          %s756 = ssub.s32 128, 128
          %757 = vsyncadd [#allocation3], %s756
          %s759 = sshll.u32 [#allocation2], 4
          %s760 = int_to_ptr.vmem [resolvable:$true] %s759
          %762 = dma.vmem_to_hbm [thread:$0]  %s760, 128, %s10, [#allocation3]
        $region68: #{tpu_custom_call.1} parent=59 // pred_fallthru
          _
        // Predicated region
        $region69: #{tpu_custom_call.1} parent=59 // pred_check
          %p763 = pneg %p285
        $region70: #{tpu_custom_call.1} parent=59 // pred_check_branch
          %765 = sbr.rel (%p763) target = $region72
        $region71: #{tpu_custom_call.1} parent=59 // pred_region
          %766 = dma.done [#allocation3], 128
        $region72: #{tpu_custom_call.1} parent=59 // pred_fallthru
          _
      $region60: #{tpu_custom_call.1} parent=5 // pred_fallthru
        _
      %p767 = scmp.le.s32.totalorder 2, %s17
      // Predicated region
      $region73: #{tpu_custom_call.1} parent=5 // pred_check
        %p768 = pneg %p767
      $region74: #{tpu_custom_call.1} parent=5 // pred_check_branch
        %770 = sbr.rel (%p768) target = $region76
      $region75: #{tpu_custom_call.1} parent=5 // pred_region
        %s771 = ssub.s32 %s17, 2
      $region76: #{tpu_custom_call.1} parent=5 // pred_fallthru
        _
    $region6: #{tpu_custom_call.1} parent=1 // loop_footer
      %s21 = sadd.s32 1, %s17
    $region7: #{tpu_custom_call.1} parent=1 // loop_footer_branch
      %16 = sbr.rel target = $region3
    $region8: #{tpu_custom_call.1} parent=1 // loop_exit
      _
    %772 = vsyncpa [#allocation3], 1
    %s773 = scalar_lea.sflag [#allocation3], 1
    %774 = vsyncpa %s773, 1

</llo_original>
